<compile_context>
chip_gen: v6e
topology: v6e:2x2x1
jax: 0.10.0
libtpu: 0.0.40
codegen_flags: <defaults>
</compile_context>

<pallas_src>
import jax
import jax.numpy as jnp
from jax.experimental import pallas as pl
from jax.experimental.pallas import tpu as pltpu


def _round_up(x, m):
    return ((x + m - 1) // m) * m


def _critic_kernel(s_ref, a_ref,
                   w1s_ref, w1a_ref, b1_ref,
                   w2_ref, b2_ref,
                   w3_ref, b3_ref,
                   w4_ref, b4_ref,
                   o_ref):
    # fc1 on split weight rows == fc1(concat([state, action], axis=1)).
    h1 = (jnp.dot(s_ref[...], w1s_ref[...], preferred_element_type=jnp.float32)
          + jnp.dot(a_ref[...], w1a_ref[...], preferred_element_type=jnp.float32)
          + b1_ref[...])
    h1 = jnp.where(h1 > 0, h1, 0.01 * h1)          # leaky_relu(0.01)

    # fc2 + leaky_relu(0.01)
    h2 = jnp.dot(h1, w2_ref[...], preferred_element_type=jnp.float32) + b2_ref[...]
    h2 = jnp.where(h2 > 0, h2, 0.01 * h2)

    # dropout(p=0.0) is the identity -> no-op

    # fc3 + relu
    h3 = jnp.dot(h2, w3_ref[...], preferred_element_type=jnp.float32) + b3_ref[...]
    h3 = jnp.maximum(h3, 0.0)

    # fc4 has N=1: compute it as a lane reduction instead of a degenerate
    # (32,1) matmul, and store lane-dense (batch on the last axis).
    q = jnp.sum(h3 * w4_ref[...], axis=-1) + b4_ref[0, 0]       # (TILE_B,)
    o_ref[...] = q[None, :].astype(o_ref.dtype)                 # (1, TILE_B)


def critic_forward(state, action, params, *, tile_b=512):
    """params: w1..w4 stored in [in, out] layout, b1..b4 as [1, out]."""
    B, sd = state.shape
    _, ad = action.shape
    h1_dim, h2_dim = params["w2"].shape
    h3_dim = params["w3"].shape[1]

    # Lane-friendly batch tile (multiple of 128); single tile for small batches.
    tb = min(tile_b, _round_up(B, 128))
    b_pad = _round_up(B, tb)
    num_tiles = b_pad // tb

    state_p = jnp.pad(state.astype(jnp.float32), ((0, b_pad - B), (0, 0)))
    action_p = jnp.pad(action.astype(jnp.float32), ((0, b_pad - B), (0, 0)))

    w1 = params["w1"]
    w1s, w1a = w1[:sd], w1[sd:]                     # fused concat
    w4_row = params["w4"].reshape(1, -1)            # (1, h3_dim)

    args = (state_p, action_p,
            w1s, w1a, params["b1"],
            params["w2"], params["b2"],
            params["w3"], params["b3"],
            w4_row, params["b4"])

    def resident_spec(a):
        # Constant block index -> weights/biases stay in VMEM across steps.
        return pl.BlockSpec(a.shape, lambda i: (0, 0))

    in_specs = [
        pl.BlockSpec((tb, sd), lambda i: (i, 0)),   # state tile
        pl.BlockSpec((tb, ad), lambda i: (i, 0)),   # action tile
    ] + [resident_spec(a) for a in args[2:]]

    out_spec = pl.BlockSpec((1, tb), lambda i: (0, i))   # lane-dense q

    flops = 2 * b_pad * (sd * h1_dim + ad * h1_dim
                         + h1_dim * h2_dim + h2_dim * h3_dim + h3_dim)
    bytes_accessed = 4 * (b_pad * (sd + ad + 1)
                          + (sd + ad) * h1_dim + h1_dim * h2_dim
                          + h2_dim * h3_dim + h3_dim
                          + h1_dim + h2_dim + h3_dim + 1)

    out = pl.pallas_call(
        _critic_kernel,
        out_shape=jax.ShapeDtypeStruct((1, b_pad), jnp.float32),
        grid=(num_tiles,),
        in_specs=in_specs,
        out_specs=out_spec,
        compiler_params=pltpu.CompilerParams(
            dimension_semantics=("parallel",)),
        cost_estimate=pl.CostEstimate(
            flops=flops, transcendentals=0, bytes_accessed=bytes_accessed),
    )(*args)

    return out[0, :B][:, None]                      # (B, 1)


def init_params(key, input_dims, hidden_layers=(64, 32, 32)):
    """Deterministic PyTorch-style (uniform +/- 1/sqrt(fan_in)) init."""
    dims = [input_dims, hidden_layers[0], hidden_layers[1], hidden_layers[2], 1]
    params = {}
    for i in range(4):
        fan_in, fan_out = dims[i], dims[i + 1]
        key, kw, kb = jax.random.split(key, 3)
        bound = 1.0 / jnp.sqrt(jnp.float32(fan_in))
        # stored directly in [in, out] layout (== W.T of the torch parameter)
        params[f"w{i+1}"] = jax.random.uniform(
            kw, (fan_in, fan_out), jnp.float32, -bound, bound)
        params[f"b{i+1}"] = jax.random.uniform(
            kb, (1, fan_out), jnp.float32, -bound, bound)
    return params


def critic_reference(state, action, params):
    """Pure-JAX reference of the same forward pass (sanity check)."""
    x = jnp.concatenate([state, action], axis=1)
    h = x @ params["w1"] + params["b1"]
    h = jnp.where(h > 0, h, 0.01 * h)
    h = h @ params["w2"] + params["b2"]
    h = jnp.where(h > 0, h, 0.01 * h)
    h = h @ params["w3"] + params["b3"]
    h = jnp.maximum(h, 0.0)
    return h @ params["w4"] + params["b4"]


if __name__ == "__main__":
    key = jax.random.PRNGKey(0)

    state_dim = 6
    action_dim = 2
    input_dims = state_dim + action_dim  # fc1 consumes concat([state, action])

    key, kp = jax.random.split(key)
    params = init_params(kp, input_dims)

    # Small-batch check (single tile, padded to 128).
    key, ks, ka = jax.random.split(key, 3)
    state = jax.random.normal(ks, (2, state_dim), jnp.float32)
    action = jax.random.normal(ka, (2, action_dim), jnp.float32)
    q = jax.block_until_ready(critic_forward(state, action, params))
    q_ref = critic_reference(state, action, params)
    assert q.shape == (2, 1)
    assert jnp.allclose(q, q_ref, atol=1e-5, rtol=1e-5)

    # Larger batch: exercises the multi-tile (padded, parallel) grid path.
    key, ks, ka = jax.random.split(key, 3)
    state_l = jax.random.normal(ks, (700, state_dim), jnp.float32)
    action_l = jax.random.normal(ka, (700, action_dim), jnp.float32)
    q_l = jax.block_until_ready(critic_forward(state_l, action_l, params))
    q_l_ref = critic_reference(state_l, action_l, params)
    assert q_l.shape == (700, 1)
    assert jnp.allclose(q_l, q_l_ref, atol=1e-4, rtol=1e-4)

    print("KERNEL_OK")
</pallas_src>

<mosaic_0001>
module attributes {stable_mosaic.version = 11 : i64} {
  func.func @_critic_kernel(%arg0: i32, %arg1: memref<128x6xf32, #tpu.memory_space<vmem>>, %arg2: memref<128x2xf32, #tpu.memory_space<vmem>>, %arg3: memref<6x64xf32, #tpu.memory_space<vmem>>, %arg4: memref<2x64xf32, #tpu.memory_space<vmem>>, %arg5: memref<1x64xf32, #tpu.memory_space<vmem>>, %arg6: memref<64x32xf32, #tpu.memory_space<vmem>>, %arg7: memref<1x32xf32, #tpu.memory_space<vmem>>, %arg8: memref<32x32xf32, #tpu.memory_space<vmem>>, %arg9: memref<1x32xf32, #tpu.memory_space<vmem>>, %arg10: memref<1x32xf32, #tpu.memory_space<vmem>>, %arg11: memref<1x1xf32, #tpu.memory_space<vmem>>, %arg12: memref<1x128xf32, #tpu.memory_space<vmem>>) attributes {dimension_semantics = [#tpu.dimension_semantics<parallel>], iteration_bounds = array<i64: 1>, scalar_prefetch = 0 : i64, scratch_operands = 0 : i64, tpu.core_type = #tpu.core_type<tc>, window_params = [{transform_indices = @transform_0, window_bounds = array<i64: 128, 6>}, {transform_indices = @transform_1, window_bounds = array<i64: 128, 2>}, {pipeline_mode = #tpu.pipeline_mode<synchronous>, transform_indices = @transform_2, window_bounds = array<i64: 6, 64>}, {pipeline_mode = #tpu.pipeline_mode<synchronous>, transform_indices = @transform_3, window_bounds = array<i64: 2, 64>}, {pipeline_mode = #tpu.pipeline_mode<synchronous>, transform_indices = @transform_4, window_bounds = array<i64: 1, 64>}, {pipeline_mode = #tpu.pipeline_mode<synchronous>, transform_indices = @transform_5, window_bounds = array<i64: 64, 32>}, {pipeline_mode = #tpu.pipeline_mode<synchronous>, transform_indices = @transform_6, window_bounds = array<i64: 1, 32>}, {pipeline_mode = #tpu.pipeline_mode<synchronous>, transform_indices = @transform_7, window_bounds = array<i64: 32, 32>}, {pipeline_mode = #tpu.pipeline_mode<synchronous>, transform_indices = @transform_8, window_bounds = array<i64: 1, 32>}, {pipeline_mode = #tpu.pipeline_mode<synchronous>, transform_indices = @transform_9, window_bounds = array<i64: 1, 32>}, {pipeline_mode = #tpu.pipeline_mode<synchronous>, transform_indices = @transform_10, window_bounds = array<i64: 1, 1>}, {transform_indices = @transform_11, window_bounds = array<i64: 1, 128>}]} {
    %c0 = arith.constant 0 : index
    %c0_0 = arith.constant 0 : index
    %0 = vector.load %arg1[%c0, %c0_0] : memref<128x6xf32, #tpu.memory_space<vmem>>, vector<128x6xf32>
    %c0_1 = arith.constant 0 : index
    %c0_2 = arith.constant 0 : index
    %1 = vector.load %arg3[%c0_1, %c0_2] : memref<6x64xf32, #tpu.memory_space<vmem>>, vector<6x64xf32>
    %cst = arith.constant dense<0.000000e+00> : vector<128x64xf32>
    %2 = tpu.matmul %0, %1, %cst {dimension_numbers = #tpu.dot_dimension_numbers<[1], [0], [0], [1], [0, 0, 1, 1], [], []>} : vector<128x6xf32>, vector<6x64xf32>, vector<128x64xf32> -> vector<128x64xf32>
    %c0_3 = arith.constant 0 : index
    %c0_4 = arith.constant 0 : index
    %3 = vector.load %arg2[%c0_3, %c0_4] : memref<128x2xf32, #tpu.memory_space<vmem>>, vector<128x2xf32>
    %c0_5 = arith.constant 0 : index
    %c0_6 = arith.constant 0 : index
    %4 = vector.load %arg4[%c0_5, %c0_6] : memref<2x64xf32, #tpu.memory_space<vmem>>, vector<2x64xf32>
    %cst_7 = arith.constant dense<0.000000e+00> : vector<128x64xf32>
    %5 = tpu.matmul %3, %4, %cst_7 {dimension_numbers = #tpu.dot_dimension_numbers<[1], [0], [0], [1], [0, 0, 1, 1], [], []>} : vector<128x2xf32>, vector<2x64xf32>, vector<128x64xf32> -> vector<128x64xf32>
    %6 = arith.addf %2, %5 : vector<128x64xf32>
    %c0_8 = arith.constant 0 : index
    %c0_9 = arith.constant 0 : index
    %7 = vector.load %arg5[%c0_8, %c0_9] : memref<1x64xf32, #tpu.memory_space<vmem>>, vector<1x64xf32>
    %8 = vector.broadcast %7 : vector<1x64xf32> to vector<128x64xf32>
    %9 = arith.addf %6, %8 : vector<128x64xf32>
    %cst_10 = arith.constant 0.000000e+00 : f32
    %10 = vector.broadcast %cst_10 : f32 to vector<128x64xf32>
    %11 = arith.cmpf ogt, %9, %10 : vector<128x64xf32>
    %cst_11 = arith.constant 0.00999999977 : f32
    %12 = vector.broadcast %cst_11 : f32 to vector<128x64xf32>
    %13 = arith.mulf %12, %9 : vector<128x64xf32>
    %14 = arith.select %11, %9, %13 : vector<128x64xi1>, vector<128x64xf32>
    %c0_12 = arith.constant 0 : index
    %c0_13 = arith.constant 0 : index
    %15 = vector.load %arg6[%c0_12, %c0_13] : memref<64x32xf32, #tpu.memory_space<vmem>>, vector<64x32xf32>
    %cst_14 = arith.constant dense<0.000000e+00> : vector<128x32xf32>
    %16 = tpu.matmul %14, %15, %cst_14 {dimension_numbers = #tpu.dot_dimension_numbers<[1], [0], [0], [1], [0, 0, 1, 1], [], []>} : vector<128x64xf32>, vector<64x32xf32>, vector<128x32xf32> -> vector<128x32xf32>
    %c0_15 = arith.constant 0 : index
    %c0_16 = arith.constant 0 : index
    %17 = vector.load %arg7[%c0_15, %c0_16] : memref<1x32xf32, #tpu.memory_space<vmem>>, vector<1x32xf32>
    %18 = vector.broadcast %17 : vector<1x32xf32> to vector<128x32xf32>
    %19 = arith.addf %16, %18 : vector<128x32xf32>
    %cst_17 = arith.constant 0.000000e+00 : f32
    %20 = vector.broadcast %cst_17 : f32 to vector<128x32xf32>
    %21 = arith.cmpf ogt, %19, %20 : vector<128x32xf32>
    %cst_18 = arith.constant 0.00999999977 : f32
    %22 = vector.broadcast %cst_18 : f32 to vector<128x32xf32>
    %23 = arith.mulf %22, %19 : vector<128x32xf32>
    %24 = arith.select %21, %19, %23 : vector<128x32xi1>, vector<128x32xf32>
    %c0_19 = arith.constant 0 : index
    %c0_20 = arith.constant 0 : index
    %25 = vector.load %arg8[%c0_19, %c0_20] : memref<32x32xf32, #tpu.memory_space<vmem>>, vector<32x32xf32>
    %cst_21 = arith.constant dense<0.000000e+00> : vector<128x32xf32>
    %26 = tpu.matmul %24, %25, %cst_21 {dimension_numbers = #tpu.dot_dimension_numbers<[1], [0], [0], [1], [0, 0, 1, 1], [], []>} : vector<128x32xf32>, vector<32x32xf32>, vector<128x32xf32> -> vector<128x32xf32>
    %c0_22 = arith.constant 0 : index
    %c0_23 = arith.constant 0 : index
    %27 = vector.load %arg9[%c0_22, %c0_23] : memref<1x32xf32, #tpu.memory_space<vmem>>, vector<1x32xf32>
    %28 = vector.broadcast %27 : vector<1x32xf32> to vector<128x32xf32>
    %29 = arith.addf %26, %28 : vector<128x32xf32>
    %cst_24 = arith.constant 0.000000e+00 : f32
    %30 = vector.broadcast %cst_24 : f32 to vector<128x32xf32>
    %31 = arith.maximumf %29, %30 : vector<128x32xf32>
    %c0_25 = arith.constant 0 : index
    %c0_26 = arith.constant 0 : index
    %32 = vector.load %arg10[%c0_25, %c0_26] : memref<1x32xf32, #tpu.memory_space<vmem>>, vector<1x32xf32>
    %33 = vector.broadcast %32 : vector<1x32xf32> to vector<128x32xf32>
    %34 = arith.mulf %31, %33 : vector<128x32xf32>
    %cst_27 = arith.constant dense<0.000000e+00> : vector<128xf32>
    %35 = vector.multi_reduction <add>, %34, %cst_27 [1] : vector<128x32xf32> to vector<128xf32>
    %c0_28 = arith.constant 0 : index
    %c0_29 = arith.constant 0 : index
    %36 = vector.load %arg11[%c0_28, %c0_29] : memref<1x1xf32, #tpu.memory_space<vmem>>, vector<1x1xf32>
    %37 = vector.extract %36[0, 0] : f32 from vector<1x1xf32>
    %38 = vector.broadcast %37 : f32 to vector<128xf32>
    %39 = arith.addf %35, %38 : vector<128xf32>
    %40 = vector.shape_cast %39 : vector<128xf32> to vector<1x128xf32>
    %c0_30 = arith.constant 0 : index
    %c0_31 = arith.constant 0 : index
    %41 = vector.load %arg12[%c0_30, %c0_31] : memref<1x128xf32, #tpu.memory_space<vmem>>, vector<1x128xf32>
    tpu.vector_store %arg12[%c0_30, %c0_31], %40 {strides = array<i32>} : memref<1x128xf32, #tpu.memory_space<vmem>>, vector<1x128xf32>,
    return
  }
  func.func @transform_0(%arg0: i32) -> (i32, i32) {
    %c0_i32 = arith.constant 0 : i32
    %c0_i32_0 = arith.constant 0 : i32
    return %arg0, %c0_i32 : i32, i32
  }
  func.func @transform_1(%arg0: i32) -> (i32, i32) {
    %c0_i32 = arith.constant 0 : i32
    %c0_i32_0 = arith.constant 0 : i32
    return %arg0, %c0_i32 : i32, i32
  }
  func.func @transform_2(%arg0: i32) -> (i32, i32) {
    %c0_i32 = arith.constant 0 : i32
    %c0_i32_0 = arith.constant 0 : i32
    %c0_i32_1 = arith.constant 0 : i32
    return %c0_i32, %c0_i32_0 : i32, i32
  }
  func.func @transform_3(%arg0: i32) -> (i32, i32) {
    %c0_i32 = arith.constant 0 : i32
    %c0_i32_0 = arith.constant 0 : i32
    %c0_i32_1 = arith.constant 0 : i32
    return %c0_i32, %c0_i32_0 : i32, i32
  }
  func.func @transform_4(%arg0: i32) -> (i32, i32) {
    %c0_i32 = arith.constant 0 : i32
    %c0_i32_0 = arith.constant 0 : i32
    %c0_i32_1 = arith.constant 0 : i32
    return %c0_i32, %c0_i32_0 : i32, i32
  }
  func.func @transform_5(%arg0: i32) -> (i32, i32) {
    %c0_i32 = arith.constant 0 : i32
    %c0_i32_0 = arith.constant 0 : i32
    %c0_i32_1 = arith.constant 0 : i32
    return %c0_i32, %c0_i32_0 : i32, i32
  }
  func.func @transform_6(%arg0: i32) -> (i32, i32) {
    %c0_i32 = arith.constant 0 : i32
    %c0_i32_0 = arith.constant 0 : i32
    %c0_i32_1 = arith.constant 0 : i32
    return %c0_i32, %c0_i32_0 : i32, i32
  }
  func.func @transform_7(%arg0: i32) -> (i32, i32) {
    %c0_i32 = arith.constant 0 : i32
    %c0_i32_0 = arith.constant 0 : i32
    %c0_i32_1 = arith.constant 0 : i32
    return %c0_i32, %c0_i32_0 : i32, i32
  }
  func.func @transform_8(%arg0: i32) -> (i32, i32) {
    %c0_i32 = arith.constant 0 : i32
    %c0_i32_0 = arith.constant 0 : i32
    %c0_i32_1 = arith.constant 0 : i32
    return %c0_i32, %c0_i32_0 : i32, i32
  }
  func.func @transform_9(%arg0: i32) -> (i32, i32) {
    %c0_i32 = arith.constant 0 : i32
    %c0_i32_0 = arith.constant 0 : i32
    %c0_i32_1 = arith.constant 0 : i32
    return %c0_i32, %c0_i32_0 : i32, i32
  }
  func.func @transform_10(%arg0: i32) -> (i32, i32) {
    %c0_i32 = arith.constant 0 : i32
    %c0_i32_0 = arith.constant 0 : i32
    %c0_i32_1 = arith.constant 0 : i32
    return %c0_i32, %c0_i32_0 : i32, i32
  }
  func.func @transform_11(%arg0: i32) -> (i32, i32) {
    %c0_i32 = arith.constant 0 : i32
    %c0_i32_0 = arith.constant 0 : i32
    return %c0_i32, %arg0 : i32, i32
  }
}

</mosaic_0001>

<llo_original>
// kernel: tpu_custom_call.1
$region0: #{tpu_custom_call.1}
  #allocation0 [shape = 'u32[]', space=smem, size = 0x4, offset = 0x4, fixed_abs, tag = 'smem constant byte address 0x4 - core index']
  #allocation1 [shape = 'u32[144,128]{1,0:T(1,128)}', space=vmem, size = 0x12000, scoped, tag = 'internal scratch']
  #allocation2 [shape = 'f32[1,1]{1,0:T(1,128)S(1)}', space=vmem, size = 0x200, scoped, tag = 'scoped memory for tpu_custom_call.1']
  %s0 = inlined_call_operand.vmem [shape: f32[128,6], index: 0, kind: input, shape index: {}]
  %s1 = inlined_call_operand.vmem [shape: f32[128,2], index: 1, kind: input, shape index: {}]
  %s2 = inlined_call_operand.vmem [shape: f32[6,64], index: 2, kind: input, shape index: {}]
  %s3 = inlined_call_operand.vmem [shape: f32[2,64], index: 3, kind: input, shape index: {}]
  %s4 = inlined_call_operand.vmem [shape: f32[1,64], index: 4, kind: input, shape index: {}]
  %s5 = inlined_call_operand.vmem [shape: f32[64,32], index: 5, kind: input, shape index: {}]
  %s6 = inlined_call_operand.vmem [shape: f32[1,32], index: 6, kind: input, shape index: {}]
  %s7 = inlined_call_operand.vmem [shape: f32[32,32], index: 7, kind: input, shape index: {}]
  %s8 = inlined_call_operand.vmem [shape: f32[1,32], index: 8, kind: input, shape index: {}]
  %s9 = inlined_call_operand.vmem [shape: f32[1,32], index: 9, kind: input, shape index: {}]
  %s10 = inlined_call_operand.<no memory space> [shape: f32[1,1], index: 10, kind: input, shape index: {}]
  %s11 = inlined_call_operand.hbm [shape: f32[1,128], index: 11, kind: output, shape index: {}]
  %s12 = sld [smem:[#allocation0]]
  $region54: #{tpu_custom_call.1} parent=0
    _
  %s14 = ssub.s32 1, %s12
  %s15 = scalar_select 0, %s14, %s12
  %v16 = vstv %s10
  %17 = vst [vmem:[#allocation2] sm:$0x1] %v16
  $region1: #{tpu_custom_call.1} parent=0
    #allocation3 [shape = 'u8[512]{0}', space=vmem, size = 0x400, scoped, tag = 'output window, operand 0, single buffered']
    #allocation4 [shape = 's32[1]{0}', space=sflag, size = 0x4, scoped, tag = 'scoped memory for tpu_custom_call.1']
    %18 = vsyncpa [#allocation4], 0
    // Predicated region
    $region2: #{tpu_custom_call.1} parent=1 // pred_check
      _
    $region3: #{tpu_custom_call.1} parent=1 // pred_check_branch
      %20 = sbr.rel (0) target = $region5
    $region4: #{tpu_custom_call.1} parent=1 // pred_region
      _
    $region5: #{tpu_custom_call.1} parent=1 // pred_fallthru
      _
    // Predicated region
    $region6: #{tpu_custom_call.1} parent=1 // pred_check
      _
    $region7: #{tpu_custom_call.1} parent=1 // pred_check_branch
      %22 = sbr.rel (0) target = $region9
    $region8: #{tpu_custom_call.1} parent=1 // pred_region
      _
    $region9: #{tpu_custom_call.1} parent=1 // pred_fallthru
      _
    // Predicated region
    $region10: #{tpu_custom_call.1} parent=1 // pred_check
      _
    $region11: #{tpu_custom_call.1} parent=1 // pred_check_branch
      %24 = sbr.rel (0) target = $region13
    $region12: #{tpu_custom_call.1} parent=1 // pred_region
      _
    $region13: #{tpu_custom_call.1} parent=1 // pred_fallthru
      _
    // Predicated region
    $region14: #{tpu_custom_call.1} parent=1 // pred_check
      _
    $region15: #{tpu_custom_call.1} parent=1 // pred_check_branch
      %26 = sbr.rel (0) target = $region17
    $region16: #{tpu_custom_call.1} parent=1 // pred_region
      _
    $region17: #{tpu_custom_call.1} parent=1 // pred_fallthru
      _
    // Predicated region
    $region18: #{tpu_custom_call.1} parent=1 // pred_check
      _
    $region19: #{tpu_custom_call.1} parent=1 // pred_check_branch
      %28 = sbr.rel (0) target = $region21
    $region20: #{tpu_custom_call.1} parent=1 // pred_region
      _
    $region21: #{tpu_custom_call.1} parent=1 // pred_fallthru
      _
    // Predicated region
    $region22: #{tpu_custom_call.1} parent=1 // pred_check
      _
    $region23: #{tpu_custom_call.1} parent=1 // pred_check_branch
      %30 = sbr.rel (0) target = $region25
    $region24: #{tpu_custom_call.1} parent=1 // pred_region
      _
    $region25: #{tpu_custom_call.1} parent=1 // pred_fallthru
      _
    // Predicated region
    $region26: #{tpu_custom_call.1} parent=1 // pred_check
      _
    $region27: #{tpu_custom_call.1} parent=1 // pred_check_branch
      %32 = sbr.rel (0) target = $region29
    $region28: #{tpu_custom_call.1} parent=1 // pred_region
      _
    $region29: #{tpu_custom_call.1} parent=1 // pred_fallthru
      _
    // Predicated region
    $region30: #{tpu_custom_call.1} parent=1 // pred_check
      _
    $region31: #{tpu_custom_call.1} parent=1 // pred_check_branch
      %34 = sbr.rel (0) target = $region33
    $region32: #{tpu_custom_call.1} parent=1 // pred_region
      _
    $region33: #{tpu_custom_call.1} parent=1 // pred_fallthru
      _
    // Predicated region
    $region34: #{tpu_custom_call.1} parent=1 // pred_check
      _
    $region35: #{tpu_custom_call.1} parent=1 // pred_check_branch
      %36 = sbr.rel (0) target = $region37
    $region36: #{tpu_custom_call.1} parent=1 // pred_region
      _
    $region37: #{tpu_custom_call.1} parent=1 // pred_fallthru
      _
    // Predicated region
    $region38: #{tpu_custom_call.1} parent=1 // pred_check
      _
    $region39: #{tpu_custom_call.1} parent=1 // pred_check_branch
      %38 = sbr.rel (0) target = $region41
    $region40: #{tpu_custom_call.1} parent=1 // pred_region
      _
    $region41: #{tpu_custom_call.1} parent=1 // pred_fallthru
      _
    // Predicated region
    $region42: #{tpu_custom_call.1} parent=1 // pred_check
      _
    $region43: #{tpu_custom_call.1} parent=1 // pred_check_branch
      %40 = sbr.rel (0) target = $region45
    $region44: #{tpu_custom_call.1} parent=1 // pred_region
      _
    $region45: #{tpu_custom_call.1} parent=1 // pred_fallthru
      _
    %v41 = vld [vmem:[%s0] sm:$0xff]
    %v42 = vld [vmem:[%s0 + $0x8] sm:$0xff]
    %v43 = vld [vmem:[%s0 + $0x10] sm:$0xff]
    %v44 = vld [vmem:[%s0 + $0x18] sm:$0xff]
    %v45 = vld [vmem:[%s0 + $0x20] sm:$0xff]
    %v46 = vld [vmem:[%s0 + $0x28] sm:$0xff]
    %v47 = vld [vmem:[%s0 + $0x30] sm:$0xff]
    %v48 = vld [vmem:[%s0 + $0x38] sm:$0xff]
    %v49 = vld [vmem:[%s0 + $0x40] sm:$0xff]
    %v50 = vld [vmem:[%s0 + $0x48] sm:$0xff]
    %v51 = vld [vmem:[%s0 + $0x50] sm:$0xff]
    %v52 = vld [vmem:[%s0 + $0x58] sm:$0xff]
    %v53 = vld [vmem:[%s0 + $0x60] sm:$0xff]
    %v54 = vld [vmem:[%s0 + $0x68] sm:$0xff]
    %v55 = vld [vmem:[%s0 + $0x70] sm:$0xff]
    %v56 = vld [vmem:[%s0 + $0x78] sm:$0xff]
    %v57 = vld [vmem:[%s2] sm:$0x3f]
    %v58 = vld [vmem:[%s1] sm:$0xff]
    %v59 = vld [vmem:[%s1 + $0x8] sm:$0xff]
    %v60 = vld [vmem:[%s1 + $0x10] sm:$0xff]
    %v61 = vld [vmem:[%s1 + $0x18] sm:$0xff]
    %v62 = vld [vmem:[%s1 + $0x20] sm:$0xff]
    %v63 = vld [vmem:[%s1 + $0x28] sm:$0xff]
    %v64 = vld [vmem:[%s1 + $0x30] sm:$0xff]
    %v65 = vld [vmem:[%s1 + $0x38] sm:$0xff]
    %v66 = vld [vmem:[%s1 + $0x40] sm:$0xff]
    %v67 = vld [vmem:[%s1 + $0x48] sm:$0xff]
    %v68 = vld [vmem:[%s1 + $0x50] sm:$0xff]
    %v69 = vld [vmem:[%s1 + $0x58] sm:$0xff]
    %v70 = vld [vmem:[%s1 + $0x60] sm:$0xff]
    %v71 = vld [vmem:[%s1 + $0x68] sm:$0xff]
    %v72 = vld [vmem:[%s1 + $0x70] sm:$0xff]
    %v73 = vld [vmem:[%s1 + $0x78] sm:$0xff]
    %v74 = vld [vmem:[%s3] sm:$0x3]
    %vm75 = vcmask 15360
    %v77 = vsel %vm75, %v58, 0
    %v80 = vsel %vm75, %v59, 0
    %v83 = vsel %vm75, %v60, 0
    %v86 = vsel %vm75, %v61, 0
    %v89 = vsel %vm75, %v62, 0
    %v92 = vsel %vm75, %v63, 0
    %v95 = vsel %vm75, %v64, 0
    %v98 = vsel %vm75, %v65, 0
    %v101 = vsel %vm75, %v66, 0
    %v104 = vsel %vm75, %v67, 0
    %v107 = vsel %vm75, %v68, 0
    %v110 = vsel %vm75, %v69, 0
    %v113 = vsel %vm75, %v70, 0
    %v116 = vsel %vm75, %v71, 0
    %v119 = vsel %vm75, %v72, 0
    %v122 = vsel %vm75, %v73, 0
    %vm124 = vcmask 1041408
    %v126 = vsel %vm124, %v74, 0
    %128 = vmatprep.subr.mxu0 0.0
    %129 = vmatpush1.msra.mxu0 0.0
    %130 = vmatprep.subr.mxu0 0.0
    %131 = vmatpush1.msra.mxu0 0.0
    %132 = vmatprep.subr.mxu0 0.0
    %133 = vmatpush1.msra.mxu0 0.0
    %134 = vmatprep.subr.mxu0 0.0
    %135 = vmatpush1.msra.mxu0 0.0
    %136 = vmatprep.subr.mxu0 0.0
    %137 = vmatpush1.msra.mxu0 0.0
    %138 = vmatprep.subr.mxu0 0.0
    %139 = vmatpush1.msra.mxu0 0.0
    %140 = vmatprep.subr.mxu0 0.0
    %141 = vmatpush1.msra.mxu0 0.0
    %142 = vmatprep.subr.mxu0 0.0
    %143 = vmatpush1.msra.mxu0 0.0
    %144 = vmatprep.subr.mxu0 0.0
    %145 = vmatpush1.msra.mxu0 0.0
    %146 = vmatprep.subr.mxu0 0.0
    %147 = vmatpush1.msra.mxu0 0.0
    %148 = vmatprep.subr.mxu0 0.0
    %149 = vmatpush1.msra.mxu0 0.0
    %150 = vmatprep.subr.mxu0 0.0
    %151 = vmatpush1.msra.mxu0 0.0
    %152 = vmatprep.subr.mxu0 0.0
    %153 = vmatpush1.msra.mxu0 0.0
    %154 = vmatprep.subr.mxu0 0.0
    %155 = vmatpush1.msra.mxu0 0.0
    %156 = vmatprep.subr.mxu0 0.0
    %157 = vmatpush1.msra.mxu0 0.0
    %158 = vmatprep.subr.mxu0 0.0
    %159 = vmatpush1.msra.mxu0 %v126
    %160 = vmatprep.subr.mxu0 0.0
    %161 = vmatpush2.msra.mxu0 0.0
    %162 = vmatprep.subr.mxu0 0.0
    %163 = vmatpush2.msra.mxu0 0.0
    %164 = vmatprep.subr.mxu0 0.0
    %165 = vmatpush2.msra.mxu0 0.0
    %166 = vmatprep.subr.mxu0 0.0
    %167 = vmatpush2.msra.mxu0 0.0
    %168 = vmatprep.subr.mxu0 0.0
    %169 = vmatpush2.msra.mxu0 0.0
    %170 = vmatprep.subr.mxu0 0.0
    %171 = vmatpush2.msra.mxu0 0.0
    %172 = vmatprep.subr.mxu0 0.0
    %173 = vmatpush2.msra.mxu0 0.0
    %174 = vmatprep.subr.mxu0 0.0
    %175 = vmatpush2.msra.mxu0 0.0
    %176 = vmatprep.subr.mxu0 0.0
    %177 = vmatpush2.msra.mxu0 0.0
    %178 = vmatprep.subr.mxu0 0.0
    %179 = vmatpush2.msra.mxu0 0.0
    %180 = vmatprep.subr.mxu0 0.0
    %181 = vmatpush2.msra.mxu0 0.0
    %182 = vmatprep.subr.mxu0 0.0
    %183 = vmatpush2.msra.mxu0 0.0
    %184 = vmatprep.subr.mxu0 0.0
    %185 = vmatpush2.msra.mxu0 0.0
    %186 = vmatprep.subr.mxu0 0.0
    %187 = vmatpush2.msra.mxu0 0.0
    %188 = vmatprep.subr.mxu0 0.0
    %189 = vmatpush2.msra.mxu0 0.0
    %190 = vmatprep.subr.mxu0 0.0
    %191 = vmatpush2.msra.mxu0 0.0
    %192 = vmatprep.mubr.f32.mxu0 0.0
    %193 = vmatmul.mubr.f32.gmra.mxu0 %v77
    %v194 = vpop.f32.mrf.mxu0
    %v195 = vadd.f32 0.0, %v194
    %v196 = vpop.f32.mrf.mxu0
    %197 = vmatprep.mubr.f32.mxu0 0.0
    %198 = vmatmul.mubr.f32.gmra.mxu0 %v80
    %v199 = vpop.f32.mrf.mxu0
    %v200 = vadd.f32 0.0, %v199
    %v201 = vpop.f32.mrf.mxu0
    %202 = vmatprep.mubr.f32.mxu0 0.0
    %203 = vmatmul.mubr.f32.gmra.mxu0 %v83
    %v204 = vpop.f32.mrf.mxu0
    %v205 = vadd.f32 0.0, %v204
    %v206 = vpop.f32.mrf.mxu0
    %207 = vmatprep.mubr.f32.mxu0 0.0
    %208 = vmatmul.mubr.f32.gmra.mxu0 %v86
    %v209 = vpop.f32.mrf.mxu0
    %v210 = vadd.f32 0.0, %v209
    %v211 = vpop.f32.mrf.mxu0
    %212 = vmatprep.mubr.f32.mxu0 0.0
    %213 = vmatmul.mubr.f32.gmra.mxu0 %v89
    %v214 = vpop.f32.mrf.mxu0
    %v215 = vadd.f32 0.0, %v214
    %v216 = vpop.f32.mrf.mxu0
    %217 = vmatprep.mubr.f32.mxu0 0.0
    %218 = vmatmul.mubr.f32.gmra.mxu0 %v92
    %v219 = vpop.f32.mrf.mxu0
    %v220 = vadd.f32 0.0, %v219
    %v221 = vpop.f32.mrf.mxu0
    %222 = vmatprep.mubr.f32.mxu0 0.0
    %223 = vmatmul.mubr.f32.gmra.mxu0 %v95
    %v224 = vpop.f32.mrf.mxu0
    %v225 = vadd.f32 0.0, %v224
    %v226 = vpop.f32.mrf.mxu0
    %227 = vmatprep.mubr.f32.mxu0 0.0
    %228 = vmatmul.mubr.f32.gmra.mxu0 %v98
    %v229 = vpop.f32.mrf.mxu0
    %v230 = vadd.f32 0.0, %v229
    %v231 = vpop.f32.mrf.mxu0
    %232 = vmatprep.mubr.f32.mxu0 0.0
    %233 = vmatmul.mubr.f32.gmra.mxu0 %v101
    %v234 = vpop.f32.mrf.mxu0
    %v235 = vadd.f32 0.0, %v234
    %v236 = vpop.f32.mrf.mxu0
    %237 = vmatprep.mubr.f32.mxu0 0.0
    %238 = vmatmul.mubr.f32.gmra.mxu0 %v104
    %v239 = vpop.f32.mrf.mxu0
    %v240 = vadd.f32 0.0, %v239
    %v241 = vpop.f32.mrf.mxu0
    %242 = vmatprep.mubr.f32.mxu0 0.0
    %243 = vmatmul.mubr.f32.gmra.mxu0 %v107
    %v244 = vpop.f32.mrf.mxu0
    %v245 = vadd.f32 0.0, %v244
    %v246 = vpop.f32.mrf.mxu0
    %247 = vmatprep.mubr.f32.mxu0 0.0
    %248 = vmatmul.mubr.f32.gmra.mxu0 %v110
    %v249 = vpop.f32.mrf.mxu0
    %v250 = vadd.f32 0.0, %v249
    %v251 = vpop.f32.mrf.mxu0
    %252 = vmatprep.mubr.f32.mxu0 0.0
    %253 = vmatmul.mubr.f32.gmra.mxu0 %v113
    %v254 = vpop.f32.mrf.mxu0
    %v255 = vadd.f32 0.0, %v254
    %v256 = vpop.f32.mrf.mxu0
    %257 = vmatprep.mubr.f32.mxu0 0.0
    %258 = vmatmul.mubr.f32.gmra.mxu0 %v116
    %v259 = vpop.f32.mrf.mxu0
    %v260 = vadd.f32 0.0, %v259
    %v261 = vpop.f32.mrf.mxu0
    %262 = vmatprep.mubr.f32.mxu0 0.0
    %263 = vmatmul.mubr.f32.gmra.mxu0 %v119
    %v264 = vpop.f32.mrf.mxu0
    %v265 = vadd.f32 0.0, %v264
    %v266 = vpop.f32.mrf.mxu0
    %267 = vmatprep.mubr.f32.mxu0 0.0
    %268 = vmatmul.mubr.f32.gmra.mxu0 %v122
    %v269 = vpop.f32.mrf.mxu0
    %v270 = vadd.f32 0.0, %v269
    %v271 = vpop.f32.mrf.mxu0
    %272 = vdwg.mxu0
    %vm273 = vcmask 48128
    %v275 = vsel %vm273, %v41, 0
    %v278 = vsel %vm273, %v42, 0
    %v281 = vsel %vm273, %v43, 0
    %v284 = vsel %vm273, %v44, 0
    %v287 = vsel %vm273, %v45, 0
    %v290 = vsel %vm273, %v46, 0
    %v293 = vsel %vm273, %v47, 0
    %v296 = vsel %vm273, %v48, 0
    %v299 = vsel %vm273, %v49, 0
    %v302 = vsel %vm273, %v50, 0
    %v305 = vsel %vm273, %v51, 0
    %v308 = vsel %vm273, %v52, 0
    %v311 = vsel %vm273, %v53, 0
    %v314 = vsel %vm273, %v54, 0
    %v317 = vsel %vm273, %v55, 0
    %v320 = vsel %vm273, %v56, 0
    %vm322 = vcmask 1045504
    %v324 = vsel %vm322, %v57, 0
    %326 = vmatprep.subr.mxu0 0.0
    %327 = vmatpush1.msra.mxu0 0.0
    %328 = vmatprep.subr.mxu0 0.0
    %329 = vmatpush1.msra.mxu0 0.0
    %330 = vmatprep.subr.mxu0 0.0
    %331 = vmatpush1.msra.mxu0 0.0
    %332 = vmatprep.subr.mxu0 0.0
    %333 = vmatpush1.msra.mxu0 0.0
    %334 = vmatprep.subr.mxu0 0.0
    %335 = vmatpush1.msra.mxu0 0.0
    %336 = vmatprep.subr.mxu0 0.0
    %337 = vmatpush1.msra.mxu0 0.0
    %338 = vmatprep.subr.mxu0 0.0
    %339 = vmatpush1.msra.mxu0 0.0
    %340 = vmatprep.subr.mxu0 0.0
    %341 = vmatpush1.msra.mxu0 0.0
    %342 = vmatprep.subr.mxu0 0.0
    %343 = vmatpush1.msra.mxu0 0.0
    %344 = vmatprep.subr.mxu0 0.0
    %345 = vmatpush1.msra.mxu0 0.0
    %346 = vmatprep.subr.mxu0 0.0
    %347 = vmatpush1.msra.mxu0 0.0
    %348 = vmatprep.subr.mxu0 0.0
    %349 = vmatpush1.msra.mxu0 0.0
    %350 = vmatprep.subr.mxu0 0.0
    %351 = vmatpush1.msra.mxu0 0.0
    %352 = vmatprep.subr.mxu0 0.0
    %353 = vmatpush1.msra.mxu0 0.0
    %354 = vmatprep.subr.mxu0 0.0
    %355 = vmatpush1.msra.mxu0 0.0
    %356 = vmatprep.subr.mxu0 0.0
    %357 = vmatpush1.msra.mxu0 %v324
    %358 = vmatprep.subr.mxu0 0.0
    %359 = vmatpush2.msra.mxu0 0.0
    %360 = vmatprep.subr.mxu0 0.0
    %361 = vmatpush2.msra.mxu0 0.0
    %362 = vmatprep.subr.mxu0 0.0
    %363 = vmatpush2.msra.mxu0 0.0
    %364 = vmatprep.subr.mxu0 0.0
    %365 = vmatpush2.msra.mxu0 0.0
    %366 = vmatprep.subr.mxu0 0.0
    %367 = vmatpush2.msra.mxu0 0.0
    %368 = vmatprep.subr.mxu0 0.0
    %369 = vmatpush2.msra.mxu0 0.0
    %370 = vmatprep.subr.mxu0 0.0
    %371 = vmatpush2.msra.mxu0 0.0
    %372 = vmatprep.subr.mxu0 0.0
    %373 = vmatpush2.msra.mxu0 0.0
    %374 = vmatprep.subr.mxu0 0.0
    %375 = vmatpush2.msra.mxu0 0.0
    %376 = vmatprep.subr.mxu0 0.0
    %377 = vmatpush2.msra.mxu0 0.0
    %378 = vmatprep.subr.mxu0 0.0
    %379 = vmatpush2.msra.mxu0 0.0
    %380 = vmatprep.subr.mxu0 0.0
    %381 = vmatpush2.msra.mxu0 0.0
    %382 = vmatprep.subr.mxu0 0.0
    %383 = vmatpush2.msra.mxu0 0.0
    %384 = vmatprep.subr.mxu0 0.0
    %385 = vmatpush2.msra.mxu0 0.0
    %386 = vmatprep.subr.mxu0 0.0
    %387 = vmatpush2.msra.mxu0 0.0
    %388 = vmatprep.subr.mxu0 0.0
    %389 = vmatpush2.msra.mxu0 0.0
    %390 = vmatprep.mubr.f32.mxu0 0.0
    %391 = vmatmul.mubr.f32.gmra.mxu0 %v275
    %v392 = vpop.f32.mrf.mxu0
    %v393 = vadd.f32 %v195, %v392
    %v394 = vpop.f32.mrf.mxu0
    %395 = vmatprep.mubr.f32.mxu0 0.0
    %396 = vmatmul.mubr.f32.gmra.mxu0 %v278
    %v397 = vpop.f32.mrf.mxu0
    %v398 = vadd.f32 %v200, %v397
    %v399 = vpop.f32.mrf.mxu0
    %400 = vmatprep.mubr.f32.mxu0 0.0
    %401 = vmatmul.mubr.f32.gmra.mxu0 %v281
    %v402 = vpop.f32.mrf.mxu0
    %v403 = vadd.f32 %v205, %v402
    %v404 = vpop.f32.mrf.mxu0
    %405 = vmatprep.mubr.f32.mxu0 0.0
    %406 = vmatmul.mubr.f32.gmra.mxu0 %v284
    %v407 = vpop.f32.mrf.mxu0
    %v408 = vadd.f32 %v210, %v407
    %v409 = vpop.f32.mrf.mxu0
    %410 = vmatprep.mubr.f32.mxu0 0.0
    %411 = vmatmul.mubr.f32.gmra.mxu0 %v287
    %v412 = vpop.f32.mrf.mxu0
    %v413 = vadd.f32 %v215, %v412
    %v414 = vpop.f32.mrf.mxu0
    %415 = vmatprep.mubr.f32.mxu0 0.0
    %416 = vmatmul.mubr.f32.gmra.mxu0 %v290
    %v417 = vpop.f32.mrf.mxu0
    %v418 = vadd.f32 %v220, %v417
    %v419 = vpop.f32.mrf.mxu0
    %420 = vmatprep.mubr.f32.mxu0 0.0
    %421 = vmatmul.mubr.f32.gmra.mxu0 %v293
    %v422 = vpop.f32.mrf.mxu0
    %v423 = vadd.f32 %v225, %v422
    %v424 = vpop.f32.mrf.mxu0
    %425 = vmatprep.mubr.f32.mxu0 0.0
    %426 = vmatmul.mubr.f32.gmra.mxu0 %v296
    %v427 = vpop.f32.mrf.mxu0
    %v428 = vadd.f32 %v230, %v427
    %v429 = vpop.f32.mrf.mxu0
    %430 = vmatprep.mubr.f32.mxu0 0.0
    %431 = vmatmul.mubr.f32.gmra.mxu0 %v299
    %v432 = vpop.f32.mrf.mxu0
    %v433 = vadd.f32 %v235, %v432
    %v434 = vpop.f32.mrf.mxu0
    %435 = vmatprep.mubr.f32.mxu0 0.0
    %436 = vmatmul.mubr.f32.gmra.mxu0 %v302
    %v437 = vpop.f32.mrf.mxu0
    %v438 = vadd.f32 %v240, %v437
    %v439 = vpop.f32.mrf.mxu0
    %440 = vmatprep.mubr.f32.mxu0 0.0
    %441 = vmatmul.mubr.f32.gmra.mxu0 %v305
    %v442 = vpop.f32.mrf.mxu0
    %v443 = vadd.f32 %v245, %v442
    %v444 = vpop.f32.mrf.mxu0
    %445 = vmatprep.mubr.f32.mxu0 0.0
    %446 = vmatmul.mubr.f32.gmra.mxu0 %v308
    %v447 = vpop.f32.mrf.mxu0
    %v448 = vadd.f32 %v250, %v447
    %v449 = vpop.f32.mrf.mxu0
    %450 = vmatprep.mubr.f32.mxu0 0.0
    %451 = vmatmul.mubr.f32.gmra.mxu0 %v311
    %v452 = vpop.f32.mrf.mxu0
    %v453 = vadd.f32 %v255, %v452
    %v454 = vpop.f32.mrf.mxu0
    %455 = vmatprep.mubr.f32.mxu0 0.0
    %456 = vmatmul.mubr.f32.gmra.mxu0 %v314
    %v457 = vpop.f32.mrf.mxu0
    %v458 = vadd.f32 %v260, %v457
    %v459 = vpop.f32.mrf.mxu0
    %460 = vmatprep.mubr.f32.mxu0 0.0
    %461 = vmatmul.mubr.f32.gmra.mxu0 %v317
    %v462 = vpop.f32.mrf.mxu0
    %v463 = vadd.f32 %v265, %v462
    %v464 = vpop.f32.mrf.mxu0
    %465 = vmatprep.mubr.f32.mxu0 0.0
    %466 = vmatmul.mubr.f32.gmra.mxu0 %v320
    %v467 = vpop.f32.mrf.mxu0
    %v468 = vadd.f32 %v270, %v467
    %v469 = vpop.f32.mrf.mxu0
    %470 = vdwg.mxu0
    %v471 = vld [vmem:[%s4] sm:$0x1]
    %v473 = vlaneseq
    %v474 = vshrl.u32 %v473, 7
    %v475 = vsub.s32 0, %v474
    %v476 = vrot.slane %v471, %v475
    %v478 = vadd.f32 %v393, %v476
    %v479 = vadd.f32 %v398, %v476
    %v480 = vadd.f32 %v403, %v476
    %v481 = vadd.f32 %v408, %v476
    %v482 = vadd.f32 %v413, %v476
    %v483 = vadd.f32 %v418, %v476
    %v484 = vadd.f32 %v423, %v476
    %v485 = vadd.f32 %v428, %v476
    %v486 = vadd.f32 %v433, %v476
    %v487 = vadd.f32 %v438, %v476
    %v488 = vadd.f32 %v443, %v476
    %v489 = vadd.f32 %v448, %v476
    %v490 = vadd.f32 %v453, %v476
    %v491 = vadd.f32 %v458, %v476
    %v492 = vadd.f32 %v463, %v476
    %v493 = vadd.f32 %v468, %v476
    %vm494 = vcmp.gt.f32.partialorder %v478, 0.0
    %vm495 = vcmp.gt.f32.partialorder %v479, 0.0
    %vm496 = vcmp.gt.f32.partialorder %v480, 0.0
    %vm497 = vcmp.gt.f32.partialorder %v481, 0.0
    %vm498 = vcmp.gt.f32.partialorder %v482, 0.0
    %vm499 = vcmp.gt.f32.partialorder %v483, 0.0
    %vm500 = vcmp.gt.f32.partialorder %v484, 0.0
    %vm501 = vcmp.gt.f32.partialorder %v485, 0.0
    %vm502 = vcmp.gt.f32.partialorder %v486, 0.0
    %vm503 = vcmp.gt.f32.partialorder %v487, 0.0
    %vm504 = vcmp.gt.f32.partialorder %v488, 0.0
    %vm505 = vcmp.gt.f32.partialorder %v489, 0.0
    %vm506 = vcmp.gt.f32.partialorder %v490, 0.0
    %vm507 = vcmp.gt.f32.partialorder %v491, 0.0
    %vm508 = vcmp.gt.f32.partialorder %v492, 0.0
    %vm509 = vcmp.gt.f32.partialorder %v493, 0.0
    %v510 = vmul.f32 %v478, 0.01
    %v511 = vmul.f32 %v479, 0.01
    %v512 = vmul.f32 %v480, 0.01
    %v513 = vmul.f32 %v481, 0.01
    %v514 = vmul.f32 %v482, 0.01
    %v515 = vmul.f32 %v483, 0.01
    %v516 = vmul.f32 %v484, 0.01
    %v517 = vmul.f32 %v485, 0.01
    %v518 = vmul.f32 %v486, 0.01
    %v519 = vmul.f32 %v487, 0.01
    %v520 = vmul.f32 %v488, 0.01
    %v521 = vmul.f32 %v489, 0.01
    %v522 = vmul.f32 %v490, 0.01
    %v523 = vmul.f32 %v491, 0.01
    %v524 = vmul.f32 %v492, 0.01
    %v525 = vmul.f32 %v493, 0.01
    %v526 = vsel %vm494, %v478, %v510
    %v527 = vsel %vm495, %v479, %v511
    %v528 = vsel %vm496, %v480, %v512
    %v529 = vsel %vm497, %v481, %v513
    %v530 = vsel %vm498, %v482, %v514
    %v531 = vsel %vm499, %v483, %v515
    %v532 = vsel %vm500, %v484, %v516
    %v533 = vsel %vm501, %v485, %v517
    %v534 = vsel %vm502, %v486, %v518
    %v535 = vsel %vm503, %v487, %v519
    %v536 = vsel %vm504, %v488, %v520
    %v537 = vsel %vm505, %v489, %v521
    %v538 = vsel %vm506, %v490, %v522
    %v539 = vsel %vm507, %v491, %v523
    %v540 = vsel %vm508, %v492, %v524
    %v541 = vsel %vm509, %v493, %v525
    %v542 = vld [vmem:[%s5] sm:$0xff]
    %v543 = vld [vmem:[%s5 + $0x8] sm:$0xff]
    %v544 = vld [vmem:[%s5 + $0x10] sm:$0xff]
    %v545 = vld [vmem:[%s5 + $0x18] sm:$0xff]
    %v546 = vld [vmem:[%s5 + $0x20] sm:$0xff]
    %v547 = vld [vmem:[%s5 + $0x28] sm:$0xff]
    %v548 = vld [vmem:[%s5 + $0x30] sm:$0xff]
    %v549 = vld [vmem:[%s5 + $0x38] sm:$0xff]
    %v550 = vld [vmem:[%s6] sm:$0x1]
    %v552 = vlaneseq
    %v553 = vshrl.u32 %v552, 7
    %v554 = vsub.s32 0, %v553
    %v555 = vrot.slane %v550, %v554
    %vm557 = vcmask 523264
    %v559 = vsel %vm557, %v526, 0
    %v562 = vsel %vm557, %v527, 0
    %v565 = vsel %vm557, %v528, 0
    %v568 = vsel %vm557, %v529, 0
    %v571 = vsel %vm557, %v530, 0
    %v574 = vsel %vm557, %v531, 0
    %v577 = vsel %vm557, %v532, 0
    %v580 = vsel %vm557, %v533, 0
    %v583 = vsel %vm557, %v534, 0
    %v586 = vsel %vm557, %v535, 0
    %v589 = vsel %vm557, %v536, 0
    %v592 = vsel %vm557, %v537, 0
    %v595 = vsel %vm557, %v538, 0
    %v598 = vsel %vm557, %v539, 0
    %v601 = vsel %vm557, %v540, 0
    %v604 = vsel %vm557, %v541, 0
    %606 = vmatprep.subr.mxu0 0.0
    %607 = vmatpush1.msra.mxu0 0.0
    %608 = vmatprep.subr.mxu0 0.0
    %609 = vmatpush1.msra.mxu0 0.0
    %610 = vmatprep.subr.mxu0 0.0
    %611 = vmatpush1.msra.mxu0 0.0
    %612 = vmatprep.subr.mxu0 0.0
    %613 = vmatpush1.msra.mxu0 0.0
    %614 = vmatprep.subr.mxu0 0.0
    %615 = vmatpush1.msra.mxu0 0.0
    %616 = vmatprep.subr.mxu0 0.0
    %617 = vmatpush1.msra.mxu0 0.0
    %618 = vmatprep.subr.mxu0 0.0
    %619 = vmatpush1.msra.mxu0 0.0
    %620 = vmatprep.subr.mxu0 0.0
    %621 = vmatpush1.msra.mxu0 0.0
    %622 = vmatprep.subr.mxu0 0.0
    %623 = vmatpush1.msra.mxu0 %v549
    %624 = vmatprep.subr.mxu0 0.0
    %625 = vmatpush1.msra.mxu0 %v548
    %626 = vmatprep.subr.mxu0 0.0
    %627 = vmatpush1.msra.mxu0 %v547
    %628 = vmatprep.subr.mxu0 0.0
    %629 = vmatpush1.msra.mxu0 %v546
    %630 = vmatprep.subr.mxu0 0.0
    %631 = vmatpush1.msra.mxu0 %v545
    %632 = vmatprep.subr.mxu0 0.0
    %633 = vmatpush1.msra.mxu0 %v544
    %634 = vmatprep.subr.mxu0 0.0
    %635 = vmatpush1.msra.mxu0 %v543
    %636 = vmatprep.subr.mxu0 0.0
    %637 = vmatpush1.msra.mxu0 %v542
    %638 = vmatprep.subr.mxu0 0.0
    %639 = vmatpush2.msra.mxu0 0.0
    %640 = vmatprep.subr.mxu0 0.0
    %641 = vmatpush2.msra.mxu0 0.0
    %642 = vmatprep.subr.mxu0 0.0
    %643 = vmatpush2.msra.mxu0 0.0
    %644 = vmatprep.subr.mxu0 0.0
    %645 = vmatpush2.msra.mxu0 0.0
    %646 = vmatprep.subr.mxu0 0.0
    %647 = vmatpush2.msra.mxu0 0.0
    %648 = vmatprep.subr.mxu0 0.0
    %649 = vmatpush2.msra.mxu0 0.0
    %650 = vmatprep.subr.mxu0 0.0
    %651 = vmatpush2.msra.mxu0 0.0
    %652 = vmatprep.subr.mxu0 0.0
    %653 = vmatpush2.msra.mxu0 0.0
    %654 = vmatprep.subr.mxu0 0.0
    %655 = vmatpush2.msra.mxu0 0.0
    %656 = vmatprep.subr.mxu0 0.0
    %657 = vmatpush2.msra.mxu0 0.0
    %658 = vmatprep.subr.mxu0 0.0
    %659 = vmatpush2.msra.mxu0 0.0
    %660 = vmatprep.subr.mxu0 0.0
    %661 = vmatpush2.msra.mxu0 0.0
    %662 = vmatprep.subr.mxu0 0.0
    %663 = vmatpush2.msra.mxu0 0.0
    %664 = vmatprep.subr.mxu0 0.0
    %665 = vmatpush2.msra.mxu0 0.0
    %666 = vmatprep.subr.mxu0 0.0
    %667 = vmatpush2.msra.mxu0 0.0
    %668 = vmatprep.subr.mxu0 0.0
    %669 = vmatpush2.msra.mxu0 0.0
    %670 = vmatprep.mubr.f32.mxu0 0.0
    %671 = vmatmul.mubr.f32.gmra.mxu0 %v559
    %v672 = vpop.f32.mrf.mxu0
    %v673 = vadd.f32 %v555, %v672
    %v674 = vpop.f32.mrf.mxu0
    %675 = vmatprep.mubr.f32.mxu0 0.0
    %676 = vmatmul.mubr.f32.gmra.mxu0 %v562
    %v677 = vpop.f32.mrf.mxu0
    %v678 = vadd.f32 %v555, %v677
    %v679 = vpop.f32.mrf.mxu0
    %680 = vmatprep.mubr.f32.mxu0 0.0
    %681 = vmatmul.mubr.f32.gmra.mxu0 %v565
    %v682 = vpop.f32.mrf.mxu0
    %v683 = vadd.f32 %v555, %v682
    %v684 = vpop.f32.mrf.mxu0
    %685 = vmatprep.mubr.f32.mxu0 0.0
    %686 = vmatmul.mubr.f32.gmra.mxu0 %v568
    %v687 = vpop.f32.mrf.mxu0
    %v688 = vadd.f32 %v555, %v687
    %v689 = vpop.f32.mrf.mxu0
    %690 = vmatprep.mubr.f32.mxu0 0.0
    %691 = vmatmul.mubr.f32.gmra.mxu0 %v571
    %v692 = vpop.f32.mrf.mxu0
    %v693 = vadd.f32 %v555, %v692
    %v694 = vpop.f32.mrf.mxu0
    %695 = vmatprep.mubr.f32.mxu0 0.0
    %696 = vmatmul.mubr.f32.gmra.mxu0 %v574
    %v697 = vpop.f32.mrf.mxu0
    %v698 = vadd.f32 %v555, %v697
    %v699 = vpop.f32.mrf.mxu0
    %700 = vmatprep.mubr.f32.mxu0 0.0
    %701 = vmatmul.mubr.f32.gmra.mxu0 %v577
    %v702 = vpop.f32.mrf.mxu0
    %v703 = vadd.f32 %v555, %v702
    %v704 = vpop.f32.mrf.mxu0
    %705 = vmatprep.mubr.f32.mxu0 0.0
    %706 = vmatmul.mubr.f32.gmra.mxu0 %v580
    %v707 = vpop.f32.mrf.mxu0
    %v708 = vadd.f32 %v555, %v707
    %v709 = vpop.f32.mrf.mxu0
    %710 = vmatprep.mubr.f32.mxu0 0.0
    %711 = vmatmul.mubr.f32.gmra.mxu0 %v583
    %v712 = vpop.f32.mrf.mxu0
    %v713 = vadd.f32 %v555, %v712
    %v714 = vpop.f32.mrf.mxu0
    %715 = vmatprep.mubr.f32.mxu0 0.0
    %716 = vmatmul.mubr.f32.gmra.mxu0 %v586
    %v717 = vpop.f32.mrf.mxu0
    %v718 = vadd.f32 %v555, %v717
    %v719 = vpop.f32.mrf.mxu0
    %720 = vmatprep.mubr.f32.mxu0 0.0
    %721 = vmatmul.mubr.f32.gmra.mxu0 %v589
    %v722 = vpop.f32.mrf.mxu0
    %v723 = vadd.f32 %v555, %v722
    %v724 = vpop.f32.mrf.mxu0
    %725 = vmatprep.mubr.f32.mxu0 0.0
    %726 = vmatmul.mubr.f32.gmra.mxu0 %v592
    %v727 = vpop.f32.mrf.mxu0
    %v728 = vadd.f32 %v555, %v727
    %v729 = vpop.f32.mrf.mxu0
    %730 = vmatprep.mubr.f32.mxu0 0.0
    %731 = vmatmul.mubr.f32.gmra.mxu0 %v595
    %v732 = vpop.f32.mrf.mxu0
    %v733 = vadd.f32 %v555, %v732
    %v734 = vpop.f32.mrf.mxu0
    %735 = vmatprep.mubr.f32.mxu0 0.0
    %736 = vmatmul.mubr.f32.gmra.mxu0 %v598
    %v737 = vpop.f32.mrf.mxu0
    %v738 = vadd.f32 %v555, %v737
    %v739 = vpop.f32.mrf.mxu0
    %740 = vmatprep.mubr.f32.mxu0 0.0
    %741 = vmatmul.mubr.f32.gmra.mxu0 %v601
    %v742 = vpop.f32.mrf.mxu0
    %v743 = vadd.f32 %v555, %v742
    %v744 = vpop.f32.mrf.mxu0
    %745 = vmatprep.mubr.f32.mxu0 0.0
    %746 = vmatmul.mubr.f32.gmra.mxu0 %v604
    %v747 = vpop.f32.mrf.mxu0
    %v748 = vadd.f32 %v555, %v747
    %v749 = vpop.f32.mrf.mxu0
    %750 = vdwg.mxu0
    %vm751 = vcmp.gt.f32.partialorder %v673, 0.0
    %vm752 = vcmp.gt.f32.partialorder %v678, 0.0
    %vm753 = vcmp.gt.f32.partialorder %v683, 0.0
    %vm754 = vcmp.gt.f32.partialorder %v688, 0.0
    %vm755 = vcmp.gt.f32.partialorder %v693, 0.0
    %vm756 = vcmp.gt.f32.partialorder %v698, 0.0
    %vm757 = vcmp.gt.f32.partialorder %v703, 0.0
    %vm758 = vcmp.gt.f32.partialorder %v708, 0.0
    %vm759 = vcmp.gt.f32.partialorder %v713, 0.0
    %vm760 = vcmp.gt.f32.partialorder %v718, 0.0
    %vm761 = vcmp.gt.f32.partialorder %v723, 0.0
    %vm762 = vcmp.gt.f32.partialorder %v728, 0.0
    %vm763 = vcmp.gt.f32.partialorder %v733, 0.0
    %vm764 = vcmp.gt.f32.partialorder %v738, 0.0
    %vm765 = vcmp.gt.f32.partialorder %v743, 0.0
    %vm766 = vcmp.gt.f32.partialorder %v748, 0.0
    %v767 = vmul.f32 %v673, 0.01
    %v768 = vmul.f32 %v678, 0.01
    %v769 = vmul.f32 %v683, 0.01
    %v770 = vmul.f32 %v688, 0.01
    %v771 = vmul.f32 %v693, 0.01
    %v772 = vmul.f32 %v698, 0.01
    %v773 = vmul.f32 %v703, 0.01
    %v774 = vmul.f32 %v708, 0.01
    %v775 = vmul.f32 %v713, 0.01
    %v776 = vmul.f32 %v718, 0.01
    %v777 = vmul.f32 %v723, 0.01
    %v778 = vmul.f32 %v728, 0.01
    %v779 = vmul.f32 %v733, 0.01
    %v780 = vmul.f32 %v738, 0.01
    %v781 = vmul.f32 %v743, 0.01
    %v782 = vmul.f32 %v748, 0.01
    %v783 = vsel %vm751, %v673, %v767
    %v784 = vsel %vm752, %v678, %v768
    %v785 = vsel %vm753, %v683, %v769
    %v786 = vsel %vm754, %v688, %v770
    %v787 = vsel %vm755, %v693, %v771
    %v788 = vsel %vm756, %v698, %v772
    %v789 = vsel %vm757, %v703, %v773
    %v790 = vsel %vm758, %v708, %v774
    %v791 = vsel %vm759, %v713, %v775
    %v792 = vsel %vm760, %v718, %v776
    %v793 = vsel %vm761, %v723, %v777
    %v794 = vsel %vm762, %v728, %v778
    %v795 = vsel %vm763, %v733, %v779
    %v796 = vsel %vm764, %v738, %v780
    %v797 = vsel %vm765, %v743, %v781
    %v798 = vsel %vm766, %v748, %v782
    %v799 = vld [vmem:[%s7] sm:$0xff]
    %v800 = vld [vmem:[%s7 + $0x8] sm:$0xff]
    %v801 = vld [vmem:[%s7 + $0x10] sm:$0xff]
    %v802 = vld [vmem:[%s7 + $0x18] sm:$0xff]
    %v803 = vld [vmem:[%s8] sm:$0x1]
    %v805 = vlaneseq
    %v806 = vshrl.u32 %v805, 7
    %v807 = vsub.s32 0, %v806
    %v808 = vrot.slane %v803, %v807
    %vm810 = vcmask 261120
    %v812 = vsel %vm810, %v783, 0
    %v815 = vsel %vm810, %v784, 0
    %v818 = vsel %vm810, %v785, 0
    %v821 = vsel %vm810, %v786, 0
    %v824 = vsel %vm810, %v787, 0
    %v827 = vsel %vm810, %v788, 0
    %v830 = vsel %vm810, %v789, 0
    %v833 = vsel %vm810, %v790, 0
    %v836 = vsel %vm810, %v791, 0
    %v839 = vsel %vm810, %v792, 0
    %v842 = vsel %vm810, %v793, 0
    %v845 = vsel %vm810, %v794, 0
    %v848 = vsel %vm810, %v795, 0
    %v851 = vsel %vm810, %v796, 0
    %v854 = vsel %vm810, %v797, 0
    %v857 = vsel %vm810, %v798, 0
    %859 = vmatprep.subr.mxu0 0.0
    %860 = vmatpush1.msra.mxu0 0.0
    %861 = vmatprep.subr.mxu0 0.0
    %862 = vmatpush1.msra.mxu0 0.0
    %863 = vmatprep.subr.mxu0 0.0
    %864 = vmatpush1.msra.mxu0 0.0
    %865 = vmatprep.subr.mxu0 0.0
    %866 = vmatpush1.msra.mxu0 0.0
    %867 = vmatprep.subr.mxu0 0.0
    %868 = vmatpush1.msra.mxu0 0.0
    %869 = vmatprep.subr.mxu0 0.0
    %870 = vmatpush1.msra.mxu0 0.0
    %871 = vmatprep.subr.mxu0 0.0
    %872 = vmatpush1.msra.mxu0 0.0
    %873 = vmatprep.subr.mxu0 0.0
    %874 = vmatpush1.msra.mxu0 0.0
    %875 = vmatprep.subr.mxu0 0.0
    %876 = vmatpush1.msra.mxu0 0.0
    %877 = vmatprep.subr.mxu0 0.0
    %878 = vmatpush1.msra.mxu0 0.0
    %879 = vmatprep.subr.mxu0 0.0
    %880 = vmatpush1.msra.mxu0 0.0
    %881 = vmatprep.subr.mxu0 0.0
    %882 = vmatpush1.msra.mxu0 0.0
    %883 = vmatprep.subr.mxu0 0.0
    %884 = vmatpush1.msra.mxu0 %v802
    %885 = vmatprep.subr.mxu0 0.0
    %886 = vmatpush1.msra.mxu0 %v801
    %887 = vmatprep.subr.mxu0 0.0
    %888 = vmatpush1.msra.mxu0 %v800
    %889 = vmatprep.subr.mxu0 0.0
    %890 = vmatpush1.msra.mxu0 %v799
    %891 = vmatprep.subr.mxu0 0.0
    %892 = vmatpush2.msra.mxu0 0.0
    %893 = vmatprep.subr.mxu0 0.0
    %894 = vmatpush2.msra.mxu0 0.0
    %895 = vmatprep.subr.mxu0 0.0
    %896 = vmatpush2.msra.mxu0 0.0
    %897 = vmatprep.subr.mxu0 0.0
    %898 = vmatpush2.msra.mxu0 0.0
    %899 = vmatprep.subr.mxu0 0.0
    %900 = vmatpush2.msra.mxu0 0.0
    %901 = vmatprep.subr.mxu0 0.0
    %902 = vmatpush2.msra.mxu0 0.0
    %903 = vmatprep.subr.mxu0 0.0
    %904 = vmatpush2.msra.mxu0 0.0
    %905 = vmatprep.subr.mxu0 0.0
    %906 = vmatpush2.msra.mxu0 0.0
    %907 = vmatprep.subr.mxu0 0.0
    %908 = vmatpush2.msra.mxu0 0.0
    %909 = vmatprep.subr.mxu0 0.0
    %910 = vmatpush2.msra.mxu0 0.0
    %911 = vmatprep.subr.mxu0 0.0
    %912 = vmatpush2.msra.mxu0 0.0
    %913 = vmatprep.subr.mxu0 0.0
    %914 = vmatpush2.msra.mxu0 0.0
    %915 = vmatprep.subr.mxu0 0.0
    %916 = vmatpush2.msra.mxu0 0.0
    %917 = vmatprep.subr.mxu0 0.0
    %918 = vmatpush2.msra.mxu0 0.0
    %919 = vmatprep.subr.mxu0 0.0
    %920 = vmatpush2.msra.mxu0 0.0
    %921 = vmatprep.subr.mxu0 0.0
    %922 = vmatpush2.msra.mxu0 0.0
    %923 = vmatprep.mubr.f32.mxu0 0.0
    %924 = vmatmul.mubr.f32.gmra.mxu0 %v812
    %v925 = vpop.f32.mrf.mxu0
    %v926 = vadd.f32 %v808, %v925
    %v927 = vpop.f32.mrf.mxu0
    %928 = vmatprep.mubr.f32.mxu0 0.0
    %929 = vmatmul.mubr.f32.gmra.mxu0 %v815
    %v930 = vpop.f32.mrf.mxu0
    %v931 = vadd.f32 %v808, %v930
    %v932 = vpop.f32.mrf.mxu0
    %933 = vmatprep.mubr.f32.mxu0 0.0
    %934 = vmatmul.mubr.f32.gmra.mxu0 %v818
    %v935 = vpop.f32.mrf.mxu0
    %v936 = vadd.f32 %v808, %v935
    %v937 = vpop.f32.mrf.mxu0
    %938 = vmatprep.mubr.f32.mxu0 0.0
    %939 = vmatmul.mubr.f32.gmra.mxu0 %v821
    %v940 = vpop.f32.mrf.mxu0
    %v941 = vadd.f32 %v808, %v940
    %v942 = vpop.f32.mrf.mxu0
    %943 = vmatprep.mubr.f32.mxu0 0.0
    %944 = vmatmul.mubr.f32.gmra.mxu0 %v824
    %v945 = vpop.f32.mrf.mxu0
    %v946 = vadd.f32 %v808, %v945
    %v947 = vpop.f32.mrf.mxu0
    %948 = vmatprep.mubr.f32.mxu0 0.0
    %949 = vmatmul.mubr.f32.gmra.mxu0 %v827
    %v950 = vpop.f32.mrf.mxu0
    %v951 = vadd.f32 %v808, %v950
    %v952 = vpop.f32.mrf.mxu0
    %953 = vmatprep.mubr.f32.mxu0 0.0
    %954 = vmatmul.mubr.f32.gmra.mxu0 %v830
    %v955 = vpop.f32.mrf.mxu0
    %v956 = vadd.f32 %v808, %v955
    %v957 = vpop.f32.mrf.mxu0
    %958 = vmatprep.mubr.f32.mxu0 0.0
    %959 = vmatmul.mubr.f32.gmra.mxu0 %v833
    %v960 = vpop.f32.mrf.mxu0
    %v961 = vadd.f32 %v808, %v960
    %v962 = vpop.f32.mrf.mxu0
    %963 = vmatprep.mubr.f32.mxu0 0.0
    %964 = vmatmul.mubr.f32.gmra.mxu0 %v836
    %v965 = vpop.f32.mrf.mxu0
    %v966 = vadd.f32 %v808, %v965
    %v967 = vpop.f32.mrf.mxu0
    %968 = vmatprep.mubr.f32.mxu0 0.0
    %969 = vmatmul.mubr.f32.gmra.mxu0 %v839
    %v970 = vpop.f32.mrf.mxu0
    %v971 = vadd.f32 %v808, %v970
    %v972 = vpop.f32.mrf.mxu0
    %973 = vmatprep.mubr.f32.mxu0 0.0
    %974 = vmatmul.mubr.f32.gmra.mxu0 %v842
    %v975 = vpop.f32.mrf.mxu0
    %v976 = vadd.f32 %v808, %v975
    %v977 = vpop.f32.mrf.mxu0
    %978 = vmatprep.mubr.f32.mxu0 0.0
    %979 = vmatmul.mubr.f32.gmra.mxu0 %v845
    %v980 = vpop.f32.mrf.mxu0
    %v981 = vadd.f32 %v808, %v980
    %v982 = vpop.f32.mrf.mxu0
    %983 = vmatprep.mubr.f32.mxu0 0.0
    %984 = vmatmul.mubr.f32.gmra.mxu0 %v848
    %v985 = vpop.f32.mrf.mxu0
    %v986 = vadd.f32 %v808, %v985
    %v987 = vpop.f32.mrf.mxu0
    %988 = vmatprep.mubr.f32.mxu0 0.0
    %989 = vmatmul.mubr.f32.gmra.mxu0 %v851
    %v990 = vpop.f32.mrf.mxu0
    %v991 = vadd.f32 %v808, %v990
    %v992 = vpop.f32.mrf.mxu0
    %993 = vmatprep.mubr.f32.mxu0 0.0
    %994 = vmatmul.mubr.f32.gmra.mxu0 %v854
    %v995 = vpop.f32.mrf.mxu0
    %v996 = vadd.f32 %v808, %v995
    %v997 = vpop.f32.mrf.mxu0
    %998 = vmatprep.mubr.f32.mxu0 0.0
    %999 = vmatmul.mubr.f32.gmra.mxu0 %v857
    %v1000 = vpop.f32.mrf.mxu0
    %v1001 = vadd.f32 %v808, %v1000
    %v1002 = vpop.f32.mrf.mxu0
    %1003 = vdwg.mxu0
    %v1004 = vmax.f32 %v926, 0.0
    %v1005 = vmax.f32 %v931, 0.0
    %v1006 = vmax.f32 %v936, 0.0
    %v1007 = vmax.f32 %v941, 0.0
    %v1008 = vmax.f32 %v946, 0.0
    %v1009 = vmax.f32 %v951, 0.0
    %v1010 = vmax.f32 %v956, 0.0
    %v1011 = vmax.f32 %v961, 0.0
    %v1012 = vmax.f32 %v966, 0.0
    %v1013 = vmax.f32 %v971, 0.0
    %v1014 = vmax.f32 %v976, 0.0
    %v1015 = vmax.f32 %v981, 0.0
    %v1016 = vmax.f32 %v986, 0.0
    %v1017 = vmax.f32 %v991, 0.0
    %v1018 = vmax.f32 %v996, 0.0
    %v1019 = vmax.f32 %v1001, 0.0
    %v1020 = vld [vmem:[%s9] sm:$0x1]
    %v1022 = vlaneseq
    %v1023 = vshrl.u32 %v1022, 7
    %v1024 = vsub.s32 0, %v1023
    %v1025 = vrot.slane %v1020, %v1024
    %v1027 = vmul.f32 %v1004, %v1025
    %v1028 = vmul.f32 %v1005, %v1025
    %v1029 = vmul.f32 %v1006, %v1025
    %v1030 = vmul.f32 %v1007, %v1025
    %v1031 = vmul.f32 %v1008, %v1025
    %v1032 = vmul.f32 %v1009, %v1025
    %v1033 = vmul.f32 %v1010, %v1025
    %v1034 = vmul.f32 %v1011, %v1025
    %v1035 = vmul.f32 %v1012, %v1025
    %v1036 = vmul.f32 %v1013, %v1025
    %v1037 = vmul.f32 %v1014, %v1025
    %v1038 = vmul.f32 %v1015, %v1025
    %v1039 = vmul.f32 %v1016, %v1025
    %v1040 = vmul.f32 %v1017, %v1025
    %v1041 = vmul.f32 %v1018, %v1025
    %v1042 = vmul.f32 %v1019, %v1025
    %v1043 = vsel %vm810, %v1027, 0.0
    %1044 = vadd.xlane.f32.xlu0 %v1043
    %v1045 = vpop.xlane.xlu0 %1044
    %v1046 = vsel %vm810, %v1028, 0.0
    %1047 = vadd.xlane.f32.xlu0 %v1046
    %v1048 = vpop.xlane.xlu0 %1047
    %v1049 = vsel %vm810, %v1029, 0.0
    %1050 = vadd.xlane.f32.xlu0 %v1049
    %v1051 = vpop.xlane.xlu0 %1050
    %v1052 = vsel %vm810, %v1030, 0.0
    %1053 = vadd.xlane.f32.xlu0 %v1052
    %v1054 = vpop.xlane.xlu0 %1053
    %v1055 = vsel %vm810, %v1031, 0.0
    %1056 = vadd.xlane.f32.xlu0 %v1055
    %v1057 = vpop.xlane.xlu0 %1056
    %v1058 = vsel %vm810, %v1032, 0.0
    %1059 = vadd.xlane.f32.xlu0 %v1058
    %v1060 = vpop.xlane.xlu0 %1059
    %v1061 = vsel %vm810, %v1033, 0.0
    %1062 = vadd.xlane.f32.xlu0 %v1061
    %v1063 = vpop.xlane.xlu0 %1062
    %v1064 = vsel %vm810, %v1034, 0.0
    %1065 = vadd.xlane.f32.xlu0 %v1064
    %v1066 = vpop.xlane.xlu0 %1065
    %v1067 = vsel %vm810, %v1035, 0.0
    %1068 = vadd.xlane.f32.xlu0 %v1067
    %v1069 = vpop.xlane.xlu0 %1068
    %v1070 = vsel %vm810, %v1036, 0.0
    %1071 = vadd.xlane.f32.xlu0 %v1070
    %v1072 = vpop.xlane.xlu0 %1071
    %v1073 = vsel %vm810, %v1037, 0.0
    %1074 = vadd.xlane.f32.xlu0 %v1073
    %v1075 = vpop.xlane.xlu0 %1074
    %v1076 = vsel %vm810, %v1038, 0.0
    %1077 = vadd.xlane.f32.xlu0 %v1076
    %v1078 = vpop.xlane.xlu0 %1077
    %v1079 = vsel %vm810, %v1039, 0.0
    %1080 = vadd.xlane.f32.xlu0 %v1079
    %v1081 = vpop.xlane.xlu0 %1080
    %v1082 = vsel %vm810, %v1040, 0.0
    %1083 = vadd.xlane.f32.xlu0 %v1082
    %v1084 = vpop.xlane.xlu0 %1083
    %v1085 = vsel %vm810, %v1041, 0.0
    %1086 = vadd.xlane.f32.xlu0 %v1085
    %v1087 = vpop.xlane.xlu0 %1086
    %v1088 = vsel %vm810, %v1042, 0.0
    %1089 = vadd.xlane.f32.xlu0 %v1088
    %v1090 = vpop.xlane.xlu0 %1089
    %v1091 = vld [vmem:[#allocation2] sm:$0x1]
    %s1092 = vtos %v1091
    %v1093 = vstv %s1092
    %v1094 = vadd.f32 %v1045, %v1093
    %v1095 = vadd.f32 %v1048, %v1093
    %v1096 = vadd.f32 %v1051, %v1093
    %v1097 = vadd.f32 %v1054, %v1093
    %v1098 = vadd.f32 %v1057, %v1093
    %v1099 = vadd.f32 %v1060, %v1093
    %v1100 = vadd.f32 %v1063, %v1093
    %v1101 = vadd.f32 %v1066, %v1093
    %v1102 = vadd.f32 %v1069, %v1093
    %v1103 = vadd.f32 %v1072, %v1093
    %v1104 = vadd.f32 %v1075, %v1093
    %v1105 = vadd.f32 %v1078, %v1093
    %v1106 = vadd.f32 %v1081, %v1093
    %v1107 = vadd.f32 %v1084, %v1093
    %v1108 = vadd.f32 %v1087, %v1093
    %v1109 = vadd.f32 %v1090, %v1093
    %v1126 = vlaneseq
    %v1127 = vand.u32 %v1126, 127
    %v1128 = vlaneseq
    %v1129 = vshrl.u32 %v1128, 7
    %v1130 = vsub.s32 %v1127, %v1129
    %v1131 = vrot.slane %v1094, %v1130
    %v1132 = vadd.s32 %v1127, 4294967288
    %v1133 = vlaneseq
    %v1134 = vshrl.u32 %v1133, 7
    %v1135 = vsub.s32 %v1132, %v1134
    %v1136 = vrot.slane %v1095, %v1135
    %vm1137 = vcmask 130112
    %v1138 = vsel %vm1137, %v1136, %v1131
    %v1139 = vadd.s32 %v1127, 4294967280
    %v1140 = vlaneseq
    %v1141 = vshrl.u32 %v1140, 7
    %v1142 = vsub.s32 %v1139, %v1141
    %v1143 = vrot.slane %v1096, %v1142
    %vm1144 = vcmask 195712
    %v1145 = vsel %vm1144, %v1143, %v1138
    %v1146 = vadd.s32 %v1127, 4294967272
    %v1147 = vlaneseq
    %v1148 = vshrl.u32 %v1147, 7
    %v1149 = vsub.s32 %v1146, %v1148
    %v1150 = vrot.slane %v1097, %v1149
    %vm1151 = vcmask 261312
    %v1152 = vsel %vm1151, %v1150, %v1145
    %v1153 = vadd.s32 %v1127, 4294967264
    %v1154 = vlaneseq
    %v1155 = vshrl.u32 %v1154, 7
    %v1156 = vsub.s32 %v1153, %v1155
    %v1157 = vrot.slane %v1098, %v1156
    %vm1158 = vcmask 326912
    %v1159 = vsel %vm1158, %v1157, %v1152
    %v1160 = vadd.s32 %v1127, 4294967256
    %v1161 = vlaneseq
    %v1162 = vshrl.u32 %v1161, 7
    %v1163 = vsub.s32 %v1160, %v1162
    %v1164 = vrot.slane %v1099, %v1163
    %vm1165 = vcmask 392512
    %v1166 = vsel %vm1165, %v1164, %v1159
    %v1167 = vadd.s32 %v1127, 4294967248
    %v1168 = vlaneseq
    %v1169 = vshrl.u32 %v1168, 7
    %v1170 = vsub.s32 %v1167, %v1169
    %v1171 = vrot.slane %v1100, %v1170
    %vm1172 = vcmask 458112
    %v1173 = vsel %vm1172, %v1171, %v1166
    %v1174 = vadd.s32 %v1127, 4294967240
    %v1175 = vlaneseq
    %v1176 = vshrl.u32 %v1175, 7
    %v1177 = vsub.s32 %v1174, %v1176
    %v1178 = vrot.slane %v1101, %v1177
    %vm1179 = vcmask 523712
    %v1180 = vsel %vm1179, %v1178, %v1173
    %v1181 = vadd.s32 %v1127, 4294967232
    %v1182 = vlaneseq
    %v1183 = vshrl.u32 %v1182, 7
    %v1184 = vsub.s32 %v1181, %v1183
    %v1185 = vrot.slane %v1102, %v1184
    %vm1186 = vcmask 589312
    %v1187 = vsel %vm1186, %v1185, %v1180
    %v1188 = vadd.s32 %v1127, 4294967224
    %v1189 = vlaneseq
    %v1190 = vshrl.u32 %v1189, 7
    %v1191 = vsub.s32 %v1188, %v1190
    %v1192 = vrot.slane %v1103, %v1191
    %vm1193 = vcmask 654912
    %v1194 = vsel %vm1193, %v1192, %v1187
    %v1195 = vadd.s32 %v1127, 4294967216
    %v1196 = vlaneseq
    %v1197 = vshrl.u32 %v1196, 7
    %v1198 = vsub.s32 %v1195, %v1197
    %v1199 = vrot.slane %v1104, %v1198
    %vm1200 = vcmask 720512
    %v1201 = vsel %vm1200, %v1199, %v1194
    %v1202 = vadd.s32 %v1127, 4294967208
    %v1203 = vlaneseq
    %v1204 = vshrl.u32 %v1203, 7
    %v1205 = vsub.s32 %v1202, %v1204
    %v1206 = vrot.slane %v1105, %v1205
    %vm1207 = vcmask 786112
    %v1208 = vsel %vm1207, %v1206, %v1201
    %v1209 = vadd.s32 %v1127, 4294967200
    %v1210 = vlaneseq
    %v1211 = vshrl.u32 %v1210, 7
    %v1212 = vsub.s32 %v1209, %v1211
    %v1213 = vrot.slane %v1106, %v1212
    %vm1214 = vcmask 851712
    %v1215 = vsel %vm1214, %v1213, %v1208
    %v1216 = vadd.s32 %v1127, 4294967192
    %v1217 = vlaneseq
    %v1218 = vshrl.u32 %v1217, 7
    %v1219 = vsub.s32 %v1216, %v1218
    %v1220 = vrot.slane %v1107, %v1219
    %vm1221 = vcmask 917312
    %v1222 = vsel %vm1221, %v1220, %v1215
    %v1223 = vadd.s32 %v1127, 4294967184
    %v1224 = vlaneseq
    %v1225 = vshrl.u32 %v1224, 7
    %v1226 = vsub.s32 %v1223, %v1225
    %v1227 = vrot.slane %v1108, %v1226
    %vm1228 = vcmask 982912
    %v1229 = vsel %vm1228, %v1227, %v1222
    %v1230 = vadd.s32 %v1127, 4294967176
    %v1231 = vlaneseq
    %v1232 = vshrl.u32 %v1231, 7
    %v1233 = vsub.s32 %v1230, %v1232
    %v1234 = vrot.slane %v1109, %v1233
    %vm1235 = vcmask 1048512
    %v1236 = vsel %vm1235, %v1234, %v1229
    %1238 = vst [vmem:[#allocation3] sm:$0x1] %v1236
    // Predicated region
    $region46: #{tpu_custom_call.1} parent=1 // pred_check
      _
    $region47: #{tpu_custom_call.1} parent=1 // pred_check_branch
      %1240 = sbr.rel (0) target = $region49
    $region48: #{tpu_custom_call.1} parent=1 // pred_region
      %s1242 = ssub.s32 16, 16
      %1243 = vsyncadd [#allocation4], %s1242
      %s1245 = sshll.u32 [#allocation3], 4
      %s1246 = int_to_ptr.vmem [resolvable:$true] %s1245
      %1248 = dma.vmem_to_hbm [thread:$0]  %s1246, 16, %s11, [#allocation4]
    $region49: #{tpu_custom_call.1} parent=1 // pred_fallthru
      _
    // Predicated region
    $region50: #{tpu_custom_call.1} parent=1 // pred_check
      _
    $region51: #{tpu_custom_call.1} parent=1 // pred_check_branch
      %1250 = sbr.rel (0) target = $region53
    $region52: #{tpu_custom_call.1} parent=1 // pred_region
      %1251 = dma.done [#allocation4], 16
    $region53: #{tpu_custom_call.1} parent=1 // pred_fallthru
      _
    %1252 = vsyncpa [#allocation4], 1

</llo_original>
